<compile_context>
chip_gen: v7x
topology: tpu7x:2x2x1
jax: 0.10.0
libtpu: 0.0.40
codegen_flags: <defaults>
</compile_context>

<pallas_src>
import functools
import math

import jax
import jax.numpy as jnp
import numpy as np
from jax.experimental import pallas as pl
from jax.experimental.pallas import tpu as pltpu

LANE = 128


# --------------------------------------------------------------------------- kernel
def _noisy_linear_kernel(x_ref, mwt_ref, swt_ref, fi_ref, fj_ref, mb_ref, sb_ref,
                         o_ref, acc_ref, *, compute_dtype):
    # grid = (layer j, out-tile o, k-tile k); k is the innermost reduction axis.
    k = pl.program_id(2)

    @pl.when(k == 0)
    def _():
        acc_ref[...] = jnp.zeros_like(acc_ref)

    x = x_ref[...]                                   # (batch, tile_k)   activation dtype
    fi = fi_ref[0]                                   # (1, tile_k)       f32
    fj = fj_ref[0]                                   # (1, tile_out)     f32
    mwt = mwt_ref[0, 0, 0].astype(compute_dtype)     # (tile_k, tile_out)
    swt = swt_ref[0, 0, 0].astype(compute_dtype)     # (tile_k, tile_out)

    xw = x.astype(compute_dtype)
    xn = (x.astype(jnp.float32) * fi).astype(compute_dtype)

    # y = x @ mean_w.T + ((x*fi) @ std_w.T) * fj   (weights stored transposed (in,out))
    y_mean = jnp.dot(xw, mwt, preferred_element_type=jnp.float32)
    y_noise = jnp.dot(xn, swt, preferred_element_type=jnp.float32)
    acc_ref[...] += y_mean + y_noise * fj

    @pl.when(k == pl.num_programs(2) - 1)
    def _():
        bias = mb_ref[0] + sb_ref[0] * fj            # (1, tile_out) f32
        o_ref[...] = (acc_ref[...] + bias).astype(o_ref.dtype)


# --------------------------------------------------------------------- tiling helpers
def _cdiv(a, b):
    return -(-a // b)


def _round_up(n, m):
    return ((n + m - 1) // m) * m


def _tile_dim(dim, cap):
    """Split dim into n tiles of size tile (multiple of 128, <= max(cap,128)) with
    minimal padding; returns (tile, n, padded = tile*n)."""
    d = _round_up(dim, LANE)
    cap = max(LANE, (cap // LANE) * LANE)
    n = _cdiv(d, cap)
    tile = _round_up(_cdiv(d, n), LANE)
    return tile, n, tile * n


def _default_vmem_limit_bytes():
    """~75% of physical VMEM per core; conservative 48 MiB fallback (safe on v7x)."""
    phys = None
    try:
        info_fn = getattr(pltpu, "get_tpu_info", None)
        if info_fn is not None:
            phys = getattr(info_fn(), "vmem_capacity_bytes", None)
    except Exception:
        phys = None
    if not phys:
        phys = 64 * 1024 * 1024          # assume v7x-sized VMEM if unknown
    return int(min(phys * 3 // 4, 96 * 1024 * 1024))


def _working_set_bytes(batch, tile_k, tile_out, w_bytes, x_bytes, o_bytes):
    w = 2 * 2 * tile_k * tile_out * w_bytes          # mean_w^T + std_w^T, double-buffered
    xb = 2 * batch * tile_k * x_bytes
    ob = 2 * batch * tile_out * o_bytes
    acc = batch * tile_out * 4
    vecs = 2 * 4 * (tile_k + 3 * tile_out)           # fi, fj, mean_b, std_b (f32)
    return w + xb + ob + acc + vecs


# --------------------------------------------------------- one-time parameter layout
def prepare_noisy_linear_params(mean_w, std_w, mean_b, std_b, *,
                                weight_dtype=jnp.bfloat16,
                                max_batch=256,
                                act_dtype=jnp.float32,
                                vmem_limit_bytes=None):
    """One-time parameter layout prep (call once; do NOT re-run per forward step)."""
    n_layers, out_f, in_f = mean_w.shape
    if vmem_limit_bytes is None:
        vmem_limit_bytes = _default_vmem_limit_bytes()
    budget = int(vmem_limit_bytes * 0.6)             # headroom for compiler scratch

    w_bytes = jnp.dtype(weight_dtype).itemsize
    x_bytes = jnp.dtype(act_dtype).itemsize

    # Tile selection: prefer full out-width (the 'o' axis drops to 1); shrink caps only
    # if the double-buffered working set would blow the VMEM budget.
    tk_cap = 1024
    to_cap = min(4096, max(1024, _round_up(out_f, LANE)))
    while True:
        tile_k, nk, in_p = _tile_dim(in_f, tk_cap)
        tile_out, no, out_p = _tile_dim(out_f, to_cap)
        fits = _working_set_bytes(max_batch, tile_k, tile_out,
                                  w_bytes, x_bytes, x_bytes) <= budget
        if fits or (tk_cap <= 256 and to_cap <= 256):
            break
        if to_cap >= tk_cap and to_cap > 256:
            to_cap //= 2
        else:
            tk_cap //= 2

    # v7x has 2 TensorCores: make sure there are at least 2 parallel grid blocks.
    if n_layers * no < 2 and _round_up(out_f, LANE) >= 2 * LANE:
        no = 2
        tile_out = _round_up(_cdiv(_round_up(out_f, LANE), no), LANE)
        out_p = tile_out * no

    pad_in, pad_out = in_p - in_f, out_p - out_f

    def block_weight(w):
        wt = jnp.transpose(w, (0, 2, 1))                        # (L, in, out)
        wt = jnp.pad(wt, ((0, 0), (0, pad_in), (0, pad_out)))
        wt = wt.reshape(n_layers, nk, tile_k, no, tile_out)
        wt = jnp.transpose(wt, (0, 3, 1, 2, 4))                 # (L, no, nk, tk, to)
        return wt.astype(weight_dtype)                          # contiguous tile-major

    mw_b = block_weight(mean_w)
    sw_b = block_weight(std_w)
    mb = jnp.pad(mean_b.astype(jnp.float32), ((0, 0), (0, pad_out)))[:, None, :]
    sb = jnp.pad(std_b.astype(jnp.float32), ((0, 0), (0, pad_out)))[:, None, :]

    return dict(mw_b=mw_b, sw_b=sw_b, mb=mb, sb=sb,
                n_layers=n_layers, in_f=in_f, out_f=out_f,
                in_p=in_p, out_p=out_p, tile_k=tile_k, tile_out=tile_out,
                nk=nk, no=no, vmem_limit_bytes=int(vmem_limit_bytes))


# ---------------------------------------------------------------------------- forward
def make_factorized_noise(key, n_layers, in_features, out_features):
    """fi: (L,1,in), fj: (L,1,out); both = sign(e)*|e|^0.5 (lane-major rows)."""
    k1, k2 = jax.random.split(key)
    ei = jax.random.normal(k1, (n_layers, 1, in_features), dtype=jnp.float32)
    ej = jax.random.normal(k2, (n_layers, 1, out_features), dtype=jnp.float32)
    fi = jnp.sign(ei) * jnp.sqrt(jnp.abs(ei))
    fj = jnp.sign(ej) * jnp.sqrt(jnp.abs(ej))
    return fi, fj


def parallel_linear_noisy(params, x, fi, fj):
    """Forward of parallel_Linear_noisy with pre-prepared params.

    x: (batch, in_f) shared across layers, or (batch, n_layers, in_f) per-layer.
    fi: (n_layers, 1, in_f), fj: (n_layers, 1, out_f) factorized noise factors.
    Returns (batch, n_layers, out_f) in x.dtype.
    """
    p = params
    n_layers, in_f, out_f = p["n_layers"], p["in_f"], p["out_f"]
    in_p, out_p = p["in_p"], p["out_p"]
    tile_k, tile_out, nk, no = p["tile_k"], p["tile_out"], p["nk"], p["no"]
    pad_in, pad_out = in_p - in_f, out_p - out_f
    batch = x.shape[0]

    # per-call noise rows are tiny; padding them per step is negligible.
    fi_p = jnp.pad(fi.astype(jnp.float32), ((0, 0), (0, 0), (0, pad_in)))
    fj_p = jnp.pad(fj.astype(jnp.float32), ((0, 0), (0, 0), (0, pad_out)))

    if x.ndim == 3:
        assert x.shape[1] == n_layers and x.shape[2] == in_f
        x_p = jnp.pad(x, ((0, 0), (0, 0), (0, pad_in))) if pad_in else x
        x_flat = x_p.reshape(batch, n_layers * in_p)     # free reshape, no transpose
        x_index = lambda j, o, k: (0, j * nk + k)
    else:
        assert x.shape[1] == in_f
        x_flat = jnp.pad(x, ((0, 0), (0, pad_in))) if pad_in else x
        x_index = lambda j, o, k: (0, k)                 # same x block for every layer

    # Small batch: HBM-bound -> keep f32 activations (accuracy; upcast bf16 weights
    # in-kernel, HBM savings preserved).  Large batch: compute-bound -> use the fast
    # low-precision MXU path (f32 accumulation either way).
    compute_dtype = p["mw_b"].dtype if batch >= 128 else jnp.float32
    kernel = functools.partial(_noisy_linear_kernel, compute_dtype=compute_dtype)

    out_flat = pl.pallas_call(
        kernel,
        out_shape=jax.ShapeDtypeStruct((batch, n_layers * out_p), x.dtype),
        grid_spec=pltpu.PrefetchScalarGridSpec(
            num_scalar_prefetch=0,
            grid=(n_layers, no, nk),
            in_specs=[
                pl.BlockSpec((batch, tile_k), x_index),                          # x
                pl.BlockSpec((1, 1, 1, tile_k, tile_out),
                             lambda j, o, k: (j, o, k, 0, 0)),                   # mean_w^T (tile-major, contiguous)
                pl.BlockSpec((1, 1, 1, tile_k, tile_out),
                             lambda j, o, k: (j, o, k, 0, 0)),                   # std_w^T
                pl.BlockSpec((1, 1, tile_k), lambda j, o, k: (j, 0, k)),         # fi row
                pl.BlockSpec((1, 1, tile_out), lambda j, o, k: (j, 0, o)),       # fj row
                pl.BlockSpec((1, 1, tile_out), lambda j, o, k: (j, 0, o)),       # mean_b
                pl.BlockSpec((1, 1, tile_out), lambda j, o, k: (j, 0, o)),       # std_b
            ],
            out_specs=pl.BlockSpec((batch, tile_out),
                                   lambda j, o, k: (0, j * no + o)),
            scratch_shapes=[pltpu.VMEM((batch, tile_out), jnp.float32)],
        ),
        compiler_params=pltpu.CompilerParams(
            dimension_semantics=("parallel", "parallel", "arbitrary"),
            vmem_limit_bytes=p["vmem_limit_bytes"]),
    )(x_flat, p["mw_b"], p["sw_b"], fi_p, fj_p, p["mb"], p["sb"])

    out = out_flat.reshape(batch, n_layers, out_p)       # free reshape back
    if pad_out:
        out = out[:, :, :out_f]
    return out


# -------------------------------------------------------------------------- reference
def reference(x, mean_w, std_w, mean_b, std_b, fi, fj):
    fj_col = jnp.transpose(fj, (0, 2, 1))                # (L, out, 1)
    weight = mean_w + std_w * (fj_col * fi)              # (L, out, in)
    bias = mean_b + std_b * fj[:, 0, :]                  # (L, out)
    eq = 'ik,jlk->ijl' if x.ndim == 2 else 'ijk,jlk->ijl'
    y = jnp.einsum(eq, x, weight, precision=jax.lax.Precision.HIGHEST)
    return y + bias[None]


if __name__ == "__main__":
    n_layers, in_features, out_features = 3, 256, 128
    batch = 8
    init_noise = 0.5

    key = jax.random.PRNGKey(0)
    kw, kb, kx2, kx3, knoise = jax.random.split(key, 5)

    # deterministic parameter init matching reset_parameters()
    bound = 1.0 / math.sqrt(in_features)
    mean_w = jax.random.uniform(kw, (n_layers, out_features, in_features),
                                minval=-bound, maxval=bound, dtype=jnp.float32)
    mean_b = jax.random.uniform(kb, (n_layers, out_features),
                                minval=-bound, maxval=bound, dtype=jnp.float32)
    std_w = jnp.full((n_layers, out_features, in_features), init_noise * bound, jnp.float32)
    std_b = jnp.full((n_layers, out_features), init_noise * bound, jnp.float32)

    fi, fj = make_factorized_noise(knoise, n_layers, in_features, out_features)

    # one-time parameter prep: exact f32 stream and default bf16 stream
    params_f32 = prepare_noisy_linear_params(mean_w, std_w, mean_b, std_b,
                                             weight_dtype=jnp.float32)
    params_bf16 = prepare_noisy_linear_params(mean_w, std_w, mean_b, std_b)  # bf16 default

    # 2D input case: (batch, in_features) shared across layers
    x2 = jax.random.normal(kx2, (batch, in_features), dtype=jnp.float32)
    out2 = jax.block_until_ready(parallel_linear_noisy(params_f32, x2, fi, fj))
    ref2 = reference(x2, mean_w, std_w, mean_b, std_b, fi, fj)
    assert out2.shape == (batch, n_layers, out_features)
    np.testing.assert_allclose(np.asarray(out2), np.asarray(ref2), rtol=1e-4, atol=1e-4)

    # 3D input case: (batch, n_layers, in_features), per-layer inputs
    x3 = jax.random.normal(kx3, (batch, n_layers, in_features), dtype=jnp.float32)
    out3 = jax.block_until_ready(parallel_linear_noisy(params_f32, x3, fi, fj))
    ref3 = reference(x3, mean_w, std_w, mean_b, std_b, fi, fj)
    assert out3.shape == (batch, n_layers, out_features)
    np.testing.assert_allclose(np.asarray(out3), np.asarray(ref3), rtol=1e-4, atol=1e-4)

    # default bf16 weight stream (halves HBM traffic of the dominant tensors)
    out3_bf16 = jax.block_until_ready(parallel_linear_noisy(params_bf16, x3, fi, fj))
    np.testing.assert_allclose(np.asarray(out3_bf16), np.asarray(ref3), rtol=5e-2, atol=5e-2)

    # unaligned shapes exercise the zero-padding / tile-blocking path
    nl_u, in_u, out_u, b_u = 2, 40, 24, 5
    kw2, kb2, kxu, knu = jax.random.split(jax.random.PRNGKey(1), 4)
    bound_u = 1.0 / math.sqrt(in_u)
    mw_u = jax.random.uniform(kw2, (nl_u, out_u, in_u),
                              minval=-bound_u, maxval=bound_u, dtype=jnp.float32)
    mb_u = jax.random.uniform(kb2, (nl_u, out_u),
                              minval=-bound_u, maxval=bound_u, dtype=jnp.float32)
    sw_u = jnp.full((nl_u, out_u, in_u), init_noise * bound_u, jnp.float32)
    sb_u = jnp.full((nl_u, out_u), init_noise * bound_u, jnp.float32)
    fi_u, fj_u = make_factorized_noise(knu, nl_u, in_u, out_u)
    params_u = prepare_noisy_linear_params(mw_u, sw_u, mb_u, sb_u,
                                           weight_dtype=jnp.float32)
    xu = jax.random.normal(kxu, (b_u, nl_u, in_u), dtype=jnp.float32)
    out_u_res = jax.block_until_ready(parallel_linear_noisy(params_u, xu, fi_u, fj_u))
    ref_u = reference(xu, mw_u, sw_u, mb_u, sb_u, fi_u, fj_u)
    assert out_u_res.shape == (b_u, nl_u, out_u)
    np.testing.assert_allclose(np.asarray(out_u_res), np.asarray(ref_u), rtol=1e-4, atol=1e-4)

    print("KERNEL_OK")
</pallas_src>

<mosaic_0001>
module attributes {stable_mosaic.version = 11 : i64} {
  func.func @_noisy_linear_kernel(%arg0: i32, %arg1: i32, %arg2: i32, %arg3: memref<8x256xf32, #tpu.memory_space<vmem>>, %arg4: memref<1x1x1x256x128xf32, #tpu.memory_space<vmem>>, %arg5: memref<1x1x1x256x128xf32, #tpu.memory_space<vmem>>, %arg6: memref<1x1x256xf32, #tpu.memory_space<vmem>>, %arg7: memref<1x1x128xf32, #tpu.memory_space<vmem>>, %arg8: memref<1x1x128xf32, #tpu.memory_space<vmem>>, %arg9: memref<1x1x128xf32, #tpu.memory_space<vmem>>, %arg10: memref<8x128xf32, #tpu.memory_space<vmem>>, %arg11: memref<8x128xf32, #tpu.memory_space<vmem>>) attributes {dimension_semantics = [#tpu.dimension_semantics<parallel>, #tpu.dimension_semantics<parallel>, #tpu.dimension_semantics<arbitrary>], iteration_bounds = array<i64: 3, 1, 1>, scalar_prefetch = 0 : i64, scratch_operands = 1 : i64, tpu.core_type = #tpu.core_type<tc>, window_params = [{transform_indices = @transform_0, window_bounds = array<i64: 8, 256>}, {transform_indices = @transform_1, window_bounds = array<i64: 1, 1, 1, 256, 128>}, {transform_indices = @transform_2, window_bounds = array<i64: 1, 1, 1, 256, 128>}, {transform_indices = @transform_3, window_bounds = array<i64: 1, 1, 256>}, {transform_indices = @transform_4, window_bounds = array<i64: 1, 1, 128>}, {transform_indices = @transform_5, window_bounds = array<i64: 1, 1, 128>}, {transform_indices = @transform_6, window_bounds = array<i64: 1, 1, 128>}, {transform_indices = @transform_7, window_bounds = array<i64: 8, 128>}]} {
    %c0_i32 = arith.constant 0 : i32
    %0 = arith.cmpi eq, %arg2, %c0_i32 : i32
    %1 = arith.extui %0 : i1 to i32
    %c0_i32_0 = arith.constant 0 : i32
    %2 = arith.cmpi ne, %1, %c0_i32_0 : i32
    scf.if %2 {
      %cst_25 = arith.constant 0.000000e+00 : f32
      %25 = vector.broadcast %cst_25 : f32 to vector<8x128xf32>
      %c0_26 = arith.constant 0 : index
      %c0_27 = arith.constant 0 : index
      %26 = vector.load %arg11[%c0_26, %c0_27] : memref<8x128xf32, #tpu.memory_space<vmem>>, vector<8x128xf32>
      tpu.vector_store %arg11[%c0_26, %c0_27], %25 {strides = array<i32>} : memref<8x128xf32, #tpu.memory_space<vmem>>, vector<8x128xf32>,
    } else {
    }
    %c0 = arith.constant 0 : index
    %c0_1 = arith.constant 0 : index
    %3 = vector.load %arg3[%c0, %c0_1] : memref<8x256xf32, #tpu.memory_space<vmem>>, vector<8x256xf32>
    %c0_2 = arith.constant 0 : index
    %c0_3 = arith.constant 0 : index
    %c0_4 = arith.constant 0 : index
    %4 = vector.load %arg6[%c0_2, %c0_3, %c0_4] : memref<1x1x256xf32, #tpu.memory_space<vmem>>, vector<1x1x256xf32>
    %5 = vector.shape_cast %4 : vector<1x1x256xf32> to vector<1x256xf32>
    %c0_5 = arith.constant 0 : index
    %c0_6 = arith.constant 0 : index
    %c0_7 = arith.constant 0 : index
    %6 = vector.load %arg7[%c0_5, %c0_6, %c0_7] : memref<1x1x128xf32, #tpu.memory_space<vmem>>, vector<1x1x128xf32>
    %7 = vector.shape_cast %6 : vector<1x1x128xf32> to vector<1x128xf32>
    %c0_8 = arith.constant 0 : index
    %c0_9 = arith.constant 0 : index
    %c0_10 = arith.constant 0 : index
    %c0_11 = arith.constant 0 : index
    %c0_12 = arith.constant 0 : index
    %8 = vector.load %arg4[%c0_8, %c0_9, %c0_10, %c0_11, %c0_12] : memref<1x1x1x256x128xf32, #tpu.memory_space<vmem>>, vector<1x1x1x256x128xf32>
    %9 = vector.shape_cast %8 : vector<1x1x1x256x128xf32> to vector<256x128xf32>
    %c0_13 = arith.constant 0 : index
    %c0_14 = arith.constant 0 : index
    %c0_15 = arith.constant 0 : index
    %c0_16 = arith.constant 0 : index
    %c0_17 = arith.constant 0 : index
    %10 = vector.load %arg5[%c0_13, %c0_14, %c0_15, %c0_16, %c0_17] : memref<1x1x1x256x128xf32, #tpu.memory_space<vmem>>, vector<1x1x1x256x128xf32>
    %11 = vector.shape_cast %10 : vector<1x1x1x256x128xf32> to vector<256x128xf32>
    %12 = vector.broadcast %5 : vector<1x256xf32> to vector<8x256xf32>
    %13 = arith.mulf %3, %12 : vector<8x256xf32>
    %cst = arith.constant dense<0.000000e+00> : vector<8x128xf32>
    %14 = tpu.matmul %3, %9, %cst {dimension_numbers = #tpu.dot_dimension_numbers<[1], [0], [0], [1], [0, 0, 1, 1], [], []>} : vector<8x256xf32>, vector<256x128xf32>, vector<8x128xf32> -> vector<8x128xf32>
    %cst_18 = arith.constant dense<0.000000e+00> : vector<8x128xf32>
    %15 = tpu.matmul %13, %11, %cst_18 {dimension_numbers = #tpu.dot_dimension_numbers<[1], [0], [0], [1], [0, 0, 1, 1], [], []>} : vector<8x256xf32>, vector<256x128xf32>, vector<8x128xf32> -> vector<8x128xf32>
    %c0_19 = arith.constant 0 : index
    %c0_20 = arith.constant 0 : index
    %16 = vector.load %arg11[%c0_19, %c0_20] : memref<8x128xf32, #tpu.memory_space<vmem>>, vector<8x128xf32>
    %17 = vector.broadcast %7 : vector<1x128xf32> to vector<8x128xf32>
    %18 = arith.mulf %15, %17 : vector<8x128xf32>
    %19 = arith.addf %14, %18 : vector<8x128xf32>
    %20 = arith.addf %16, %19 : vector<8x128xf32>
    %c0_21 = arith.constant 0 : index
    %c0_22 = arith.constant 0 : index
    %21 = vector.load %arg11[%c0_21, %c0_22] : memref<8x128xf32, #tpu.memory_space<vmem>>, vector<8x128xf32>
    tpu.vector_store %arg11[%c0_21, %c0_22], %20 {strides = array<i32>} : memref<8x128xf32, #tpu.memory_space<vmem>>, vector<8x128xf32>,
    %c0_i32_23 = arith.constant 0 : i32
    %22 = arith.cmpi eq, %arg2, %c0_i32_23 : i32
    %23 = arith.extui %22 : i1 to i32
    %c0_i32_24 = arith.constant 0 : i32
    %24 = arith.cmpi ne, %23, %c0_i32_24 : i32
    scf.if %24 {
      %c0_25 = arith.constant 0 : index
      %c0_26 = arith.constant 0 : index
      %c0_27 = arith.constant 0 : index
      %25 = vector.load %arg8[%c0_25, %c0_26, %c0_27] : memref<1x1x128xf32, #tpu.memory_space<vmem>>, vector<1x1x128xf32>
      %26 = vector.shape_cast %25 : vector<1x1x128xf32> to vector<1x128xf32>
      %c0_28 = arith.constant 0 : index
      %c0_29 = arith.constant 0 : index
      %c0_30 = arith.constant 0 : index
      %27 = vector.load %arg9[%c0_28, %c0_29, %c0_30] : memref<1x1x128xf32, #tpu.memory_space<vmem>>, vector<1x1x128xf32>
      %28 = vector.shape_cast %27 : vector<1x1x128xf32> to vector<1x128xf32>
      %29 = arith.mulf %28, %7 : vector<1x128xf32>
      %30 = arith.addf %26, %29 : vector<1x128xf32>
      %c0_31 = arith.constant 0 : index
      %c0_32 = arith.constant 0 : index
      %31 = vector.load %arg11[%c0_31, %c0_32] : memref<8x128xf32, #tpu.memory_space<vmem>>, vector<8x128xf32>
      %32 = vector.broadcast %30 : vector<1x128xf32> to vector<8x128xf32>
      %33 = arith.addf %31, %32 : vector<8x128xf32>
      %c0_33 = arith.constant 0 : index
      %c0_34 = arith.constant 0 : index
      %34 = vector.load %arg10[%c0_33, %c0_34] : memref<8x128xf32, #tpu.memory_space<vmem>>, vector<8x128xf32>
      tpu.vector_store %arg10[%c0_33, %c0_34], %33 {strides = array<i32>} : memref<8x128xf32, #tpu.memory_space<vmem>>, vector<8x128xf32>,
    } else {
    }
    return
  }
  func.func @transform_0(%arg0: i32, %arg1: i32, %arg2: i32) -> (i32, i32) {
    %c0_i32 = arith.constant 0 : i32
    %c0_i32_0 = arith.constant 0 : i32
    return %c0_i32, %arg2 : i32, i32
  }
  func.func @transform_1(%arg0: i32, %arg1: i32, %arg2: i32) -> (i32, i32, i32, i32, i32) {
    %c0_i32 = arith.constant 0 : i32
    %c0_i32_0 = arith.constant 0 : i32
    %c0_i32_1 = arith.constant 0 : i32
    return %arg0, %arg1, %arg2, %c0_i32, %c0_i32_0 : i32, i32, i32, i32, i32
  }
  func.func @transform_2(%arg0: i32, %arg1: i32, %arg2: i32) -> (i32, i32, i32, i32, i32) {
    %c0_i32 = arith.constant 0 : i32
    %c0_i32_0 = arith.constant 0 : i32
    %c0_i32_1 = arith.constant 0 : i32
    return %arg0, %arg1, %arg2, %c0_i32, %c0_i32_0 : i32, i32, i32, i32, i32
  }
  func.func @transform_3(%arg0: i32, %arg1: i32, %arg2: i32) -> (i32, i32, i32) {
    %c0_i32 = arith.constant 0 : i32
    %c0_i32_0 = arith.constant 0 : i32
    return %arg0, %c0_i32, %arg2 : i32, i32, i32
  }
  func.func @transform_4(%arg0: i32, %arg1: i32, %arg2: i32) -> (i32, i32, i32) {
    %c0_i32 = arith.constant 0 : i32
    %c0_i32_0 = arith.constant 0 : i32
    return %arg0, %c0_i32, %arg1 : i32, i32, i32
  }
  func.func @transform_5(%arg0: i32, %arg1: i32, %arg2: i32) -> (i32, i32, i32) {
    %c0_i32 = arith.constant 0 : i32
    %c0_i32_0 = arith.constant 0 : i32
    return %arg0, %c0_i32, %arg1 : i32, i32, i32
  }
  func.func @transform_6(%arg0: i32, %arg1: i32, %arg2: i32) -> (i32, i32, i32) {
    %c0_i32 = arith.constant 0 : i32
    %c0_i32_0 = arith.constant 0 : i32
    return %arg0, %c0_i32, %arg1 : i32, i32, i32
  }
  func.func @transform_7(%arg0: i32, %arg1: i32, %arg2: i32) -> (i32, i32) {
    %c1_i32 = arith.constant 1 : i32
    %0 = arith.muli %arg0, %c1_i32 : i32
    %1 = arith.addi %0, %arg1 : i32
    %c0_i32 = arith.constant 0 : i32
    %c0_i32_0 = arith.constant 0 : i32
    return %c0_i32, %1 : i32, i32
  }
}

</mosaic_0001>

<llo_original>
// kernel: tpu_custom_call.1
$region0: #{tpu_custom_call.1}
  #allocation0 [shape = 'u32[]', space=smem, size = 0x4, offset = 0x4, fixed_abs, tag = 'smem constant byte address 0x4 - core index']
  #allocation1 [shape = 'u32[144,128]{1,0:T(1,128)}', space=vmem, size = 0x12000, scoped, tag = 'internal scratch']
  #allocation2 [shape = 'f32[8,128]{1,0:T(8,128)}', space=vmem, size = 0x1000, scoped, tag = 'scratch operand']
  %s0 = inlined_call_operand.hbm [shape: f32[8,256], index: 0, kind: input, shape index: {}]
  %s1 = inlined_call_operand.hbm [shape: f32[3,1,1,256,128], index: 1, kind: input, shape index: {}]
  %s2 = inlined_call_operand.hbm [shape: f32[3,1,1,256,128], index: 2, kind: input, shape index: {}]
  %s3 = inlined_call_operand.vmem [shape: f32[3,1,256], index: 3, kind: input, shape index: {}]
  %s4 = inlined_call_operand.vmem [shape: f32[3,1,128], index: 4, kind: input, shape index: {}]
  %s5 = inlined_call_operand.vmem [shape: f32[3,1,128], index: 5, kind: input, shape index: {}]
  %s6 = inlined_call_operand.vmem [shape: f32[3,1,128], index: 6, kind: input, shape index: {}]
  %s7 = inlined_call_operand.hbm [shape: f32[8,384], index: 7, kind: output, shape index: {}]
  %s8 = sld [smem:[#allocation0]]
  $region81: #{tpu_custom_call.1} parent=0
    _
  %s10 = ssub.s32 1, %s8
  %s11 = scalar_select 0, %s10, %s8
  $region1: #{tpu_custom_call.1} parent=0
    #allocation3 [shape = 'u8[8192]{0}', space=vmem, size = 0x2000, scoped, tag = 'input window, operand 0, single buffered']
    #allocation4 [shape = 's32[2]{0}', space=sflag, size = 0x8, scoped, tag = 'scoped memory for tpu_custom_call.1']
    #allocation5 [shape = 's32[2]{0}', space=sflag, size = 0x8, scoped, tag = 'scoped memory for tpu_custom_call.1']
    #allocation6 [shape = 'u8[262144]{0}', space=vmem, size = 0x40000, scoped, tag = 'input window, operand 1']
    #allocation7 [shape = 's32[2]{0}', space=sflag, size = 0x8, scoped, tag = 'scoped memory for tpu_custom_call.1']
    #allocation8 [shape = 'u8[262144]{0}', space=vmem, size = 0x40000, scoped, tag = 'input window, operand 2']
    #allocation9 [shape = 'u8[8192]{0}', space=vmem, size = 0x2000, scoped, tag = 'output window, operand 0']
    %12 = vsyncpa [#allocation4], 0
    %13 = vsyncpa [#allocation7], 0
    %s14 = scalar_lea.sflag [#allocation7], 1
    %15 = vsyncpa %s14, 0
    %16 = vsyncpa [#allocation5], 0
    %s17 = scalar_lea.sflag [#allocation5], 1
    %18 = vsyncpa %s17, 0
    loop: start=0, step=1, limit=5
    $region2: #{tpu_custom_call.1} parent=1 // loop_pre_header
      _
    $region3: #{tpu_custom_call.1} parent=1 // loop_header
      %s20 = sphi 0, %s24
      %p21 = scmp.ge.s32.totalorder %s20, 5
      %s27 = sphi 0, %s46
      %s28 = sphi 0, %s42
      %s29 = sphi 0, %s38
      %s30 = sphi 0, %s27
      %s31 = sphi 0, %s28
      %s32 = sphi 0, %s29
      %s33 = sphi 0, %s30
      %s34 = sphi 0, %s31
      %s35 = sphi 0, %s32
      %s49 = sphi 0, %s51
      %s52 = sphi 0, %s49
      %s53 = sphi 0, %s52
      %s69 = sphi 0, %s53
      %s79 = sphi 0, %s81
      %s82 = sphi 0, %s79
      %s83 = sphi 0, %s82
      %s99 = sphi 0, %s83
      %s109 = sphi 0, %s111
      %s112 = sphi 0, %s109
      %s113 = sphi 0, %s112
      %s129 = sphi 0, %s113
      %s137 = sphi 0, %s139
      %s140 = sphi 0, %s137
      %s141 = sphi 0, %s140
      %s157 = sphi 0, %s141
      %s165 = sphi 0, %s167
      %s168 = sphi 0, %s165
      %s169 = sphi 0, %s168
      %s185 = sphi 0, %s169
      %s193 = sphi 0, %s195
      %s196 = sphi 0, %s193
      %s197 = sphi 0, %s196
      %s213 = sphi 0, %s197
      %s221 = sphi 0, %s223
      %s224 = sphi 0, %s221
      %s225 = sphi 0, %s224
      %s241 = sphi 0, %s225
      %s249 = sphi 0, %s251
      %s252 = sphi 0, %s249
      %s253 = sphi 0, %s252
      %s269 = sphi 0, %s253
    $region4: #{tpu_custom_call.1} parent=1 // loop_header_branch
      %23 = sbr.rel (%p21) target = $region8
    $region5: #{tpu_custom_call.1} parent=1 // loop_body
      %s25 = ssub.s32 %s20, 1
      %s26 = ssub.s32 %s20, 2
      %s36 = sadd.s32 1, %s29
      %p37 = scmp.ge.s32.totalorder %s36, 1
      %s38 = scalar_select %p37, 0, %s36
      %s39 = sadd.s32 1, %s28
      %s40 = scalar_select %p37, %s39, %s28
      %p41 = scmp.ge.s32.totalorder %s40, 1
      %s42 = scalar_select %p41, 0, %s40
      %s43 = sadd.s32 1, %s27
      %s44 = scalar_select %p41, %s43, %s27
      %p45 = scmp.ge.s32.totalorder %s44, 3
      %s46 = scalar_select %p45, 0, %s44
      %s47 = ssub.s32 %s29, %s38
      %p48 = scmp.eq.s32.totalorder %s47, 0
      %s50 = sadd.s32 %s49, 1
      %s51 = scalar_select %p48, %s49, %s50
      %p54 = pneg %p48
      %p55 = scmp.eq.s32.totalorder %s20, 2
      %p56 = por %p54, %p55
      %p57 = scmp.ne.s32.totalorder %s49, %s52
      %p58 = scmp.eq.s32.totalorder %s20, 0
      %p59 = por %p57, %p58
      %p60 = scmp.ne.s32.totalorder %s49, %s52
      %p61 = scmp.eq.s32.totalorder %s25, 2
      %p62 = por %p60, %p61
      %p63 = scmp.ne.s32.totalorder %s52, %s53
      %p64 = scmp.eq.s32.totalorder %s25, 0
      %p65 = por %p63, %p64
      %p66 = scmp.ne.s32.totalorder %s52, %s53
      %p67 = scmp.eq.s32.totalorder %s26, 2
      %p68 = por %p66, %p67
      %p70 = scmp.ne.s32.totalorder %s53, %s69
      %p71 = scmp.eq.s32.totalorder %s26, 0
      %p72 = por %p70, %p71
      %s73 = ssub.s32 %s27, %s46
      %s74 = ssub.s32 %s28, %s42
      %s75 = sor.u32 %s73, %s74
      %s76 = ssub.s32 %s29, %s38
      %s77 = sor.u32 %s75, %s76
      %p78 = scmp.eq.s32.totalorder %s77, 0
      %s80 = sadd.s32 %s79, 1
      %s81 = scalar_select %p78, %s79, %s80
      %p84 = pneg %p78
      %p85 = scmp.eq.s32.totalorder %s20, 2
      %p86 = por %p84, %p85
      %p87 = scmp.ne.s32.totalorder %s79, %s82
      %p88 = scmp.eq.s32.totalorder %s20, 0
      %p89 = por %p87, %p88
      %p90 = scmp.ne.s32.totalorder %s79, %s82
      %p91 = scmp.eq.s32.totalorder %s25, 2
      %p92 = por %p90, %p91
      %p93 = scmp.ne.s32.totalorder %s82, %s83
      %p94 = scmp.eq.s32.totalorder %s25, 0
      %p95 = por %p93, %p94
      %p96 = scmp.ne.s32.totalorder %s82, %s83
      %p97 = scmp.eq.s32.totalorder %s26, 2
      %p98 = por %p96, %p97
      %p100 = scmp.ne.s32.totalorder %s83, %s99
      %p101 = scmp.eq.s32.totalorder %s26, 0
      %p102 = por %p100, %p101
      %s103 = ssub.s32 %s27, %s46
      %s104 = ssub.s32 %s28, %s42
      %s105 = sor.u32 %s103, %s104
      %s106 = ssub.s32 %s29, %s38
      %s107 = sor.u32 %s105, %s106
      %p108 = scmp.eq.s32.totalorder %s107, 0
      %s110 = sadd.s32 %s109, 1
      %s111 = scalar_select %p108, %s109, %s110
      %p114 = pneg %p108
      %p115 = scmp.eq.s32.totalorder %s20, 2
      %p116 = por %p114, %p115
      %p117 = scmp.ne.s32.totalorder %s109, %s112
      %p118 = scmp.eq.s32.totalorder %s20, 0
      %p119 = por %p117, %p118
      %p120 = scmp.ne.s32.totalorder %s109, %s112
      %p121 = scmp.eq.s32.totalorder %s25, 2
      %p122 = por %p120, %p121
      %p123 = scmp.ne.s32.totalorder %s112, %s113
      %p124 = scmp.eq.s32.totalorder %s25, 0
      %p125 = por %p123, %p124
      %p126 = scmp.ne.s32.totalorder %s112, %s113
      %p127 = scmp.eq.s32.totalorder %s26, 2
      %p128 = por %p126, %p127
      %p130 = scmp.ne.s32.totalorder %s113, %s129
      %p131 = scmp.eq.s32.totalorder %s26, 0
      %p132 = por %p130, %p131
      %s133 = ssub.s32 %s27, %s46
      %s134 = ssub.s32 %s29, %s38
      %s135 = sor.u32 %s133, %s134
      %p136 = scmp.eq.s32.totalorder %s135, 0
      %s138 = sadd.s32 %s137, 1
      %s139 = scalar_select %p136, %s137, %s138
      %p142 = pneg %p136
      %p143 = scmp.eq.s32.totalorder %s20, 2
      %p144 = por %p142, %p143
      %p145 = scmp.ne.s32.totalorder %s137, %s140
      %p146 = scmp.eq.s32.totalorder %s20, 0
      %p147 = por %p145, %p146
      %p148 = scmp.ne.s32.totalorder %s137, %s140
      %p149 = scmp.eq.s32.totalorder %s25, 2
      %p150 = por %p148, %p149
      %p151 = scmp.ne.s32.totalorder %s140, %s141
      %p152 = scmp.eq.s32.totalorder %s25, 0
      %p153 = por %p151, %p152
      %p154 = scmp.ne.s32.totalorder %s140, %s141
      %p155 = scmp.eq.s32.totalorder %s26, 2
      %p156 = por %p154, %p155
      %p158 = scmp.ne.s32.totalorder %s141, %s157
      %p159 = scmp.eq.s32.totalorder %s26, 0
      %p160 = por %p158, %p159
      %s161 = ssub.s32 %s27, %s46
      %s162 = ssub.s32 %s28, %s42
      %s163 = sor.u32 %s161, %s162
      %p164 = scmp.eq.s32.totalorder %s163, 0
      %s166 = sadd.s32 %s165, 1
      %s167 = scalar_select %p164, %s165, %s166
      %p170 = pneg %p164
      %p171 = scmp.eq.s32.totalorder %s20, 2
      %p172 = por %p170, %p171
      %p173 = scmp.ne.s32.totalorder %s165, %s168
      %p174 = scmp.eq.s32.totalorder %s20, 0
      %p175 = por %p173, %p174
      %p176 = scmp.ne.s32.totalorder %s165, %s168
      %p177 = scmp.eq.s32.totalorder %s25, 2
      %p178 = por %p176, %p177
      %p179 = scmp.ne.s32.totalorder %s168, %s169
      %p180 = scmp.eq.s32.totalorder %s25, 0
      %p181 = por %p179, %p180
      %p182 = scmp.ne.s32.totalorder %s168, %s169
      %p183 = scmp.eq.s32.totalorder %s26, 2
      %p184 = por %p182, %p183
      %p186 = scmp.ne.s32.totalorder %s169, %s185
      %p187 = scmp.eq.s32.totalorder %s26, 0
      %p188 = por %p186, %p187
      %s189 = ssub.s32 %s27, %s46
      %s190 = ssub.s32 %s28, %s42
      %s191 = sor.u32 %s189, %s190
      %p192 = scmp.eq.s32.totalorder %s191, 0
      %s194 = sadd.s32 %s193, 1
      %s195 = scalar_select %p192, %s193, %s194
      %p198 = pneg %p192
      %p199 = scmp.eq.s32.totalorder %s20, 2
      %p200 = por %p198, %p199
      %p201 = scmp.ne.s32.totalorder %s193, %s196
      %p202 = scmp.eq.s32.totalorder %s20, 0
      %p203 = por %p201, %p202
      %p204 = scmp.ne.s32.totalorder %s193, %s196
      %p205 = scmp.eq.s32.totalorder %s25, 2
      %p206 = por %p204, %p205
      %p207 = scmp.ne.s32.totalorder %s196, %s197
      %p208 = scmp.eq.s32.totalorder %s25, 0
      %p209 = por %p207, %p208
      %p210 = scmp.ne.s32.totalorder %s196, %s197
      %p211 = scmp.eq.s32.totalorder %s26, 2
      %p212 = por %p210, %p211
      %p214 = scmp.ne.s32.totalorder %s197, %s213
      %p215 = scmp.eq.s32.totalorder %s26, 0
      %p216 = por %p214, %p215
      %s217 = ssub.s32 %s27, %s46
      %s218 = ssub.s32 %s28, %s42
      %s219 = sor.u32 %s217, %s218
      %p220 = scmp.eq.s32.totalorder %s219, 0
      %s222 = sadd.s32 %s221, 1
      %s223 = scalar_select %p220, %s221, %s222
      %p226 = pneg %p220
      %p227 = scmp.eq.s32.totalorder %s20, 2
      %p228 = por %p226, %p227
      %p229 = scmp.ne.s32.totalorder %s221, %s224
      %p230 = scmp.eq.s32.totalorder %s20, 0
      %p231 = por %p229, %p230
      %p232 = scmp.ne.s32.totalorder %s221, %s224
      %p233 = scmp.eq.s32.totalorder %s25, 2
      %p234 = por %p232, %p233
      %p235 = scmp.ne.s32.totalorder %s224, %s225
      %p236 = scmp.eq.s32.totalorder %s25, 0
      %p237 = por %p235, %p236
      %p238 = scmp.ne.s32.totalorder %s224, %s225
      %p239 = scmp.eq.s32.totalorder %s26, 2
      %p240 = por %p238, %p239
      %p242 = scmp.ne.s32.totalorder %s225, %s241
      %p243 = scmp.eq.s32.totalorder %s26, 0
      %p244 = por %p242, %p243
      %s245 = sadd.s32 %s27, %s28
      %s246 = sadd.s32 %s46, %s42
      %s247 = ssub.s32 %s245, %s246
      %p248 = scmp.eq.s32.totalorder %s247, 0
      %s250 = sadd.s32 %s249, 1
      %s251 = scalar_select %p248, %s249, %s250
      %p254 = pneg %p248
      %p255 = scmp.eq.s32.totalorder %s20, 2
      %p256 = por %p254, %p255
      %p257 = scmp.ne.s32.totalorder %s249, %s252
      %p258 = scmp.eq.s32.totalorder %s20, 0
      %p259 = por %p257, %p258
      %p260 = scmp.ne.s32.totalorder %s249, %s252
      %p261 = scmp.eq.s32.totalorder %s25, 2
      %p262 = por %p260, %p261
      %p263 = scmp.ne.s32.totalorder %s252, %s253
      %p264 = scmp.eq.s32.totalorder %s25, 0
      %p265 = por %p263, %p264
      %p266 = scmp.ne.s32.totalorder %s252, %s253
      %p267 = scmp.eq.s32.totalorder %s26, 2
      %p268 = por %p266, %p267
      %p270 = scmp.ne.s32.totalorder %s253, %s269
      %p271 = scmp.eq.s32.totalorder %s26, 0
      %p272 = por %p270, %p271
      %p273 = scmp.le.s32.totalorder 1, %s20
      %p274 = scmp.lt.s32.totalorder %s20, 4
      %p275 = pnand %p273, %p274
      %p276 = pneg %p275
      // Predicated region
      $region9: #{tpu_custom_call.1} parent=5 // pred_check
        _
      $region10: #{tpu_custom_call.1} parent=5 // pred_check_branch
        %278 = sbr.rel (%p275) target = $region12
      $region11: #{tpu_custom_call.1} parent=5 // pred_region
        %s279 = ssub.s32 %s20, 1
        // Predicated region
        $region13: #{tpu_custom_call.1} parent=11 // pred_check
          %p280 = pneg %p65
        $region14: #{tpu_custom_call.1} parent=11 // pred_check_branch
          %282 = sbr.rel (%p280) target = $region16
        $region15: #{tpu_custom_call.1} parent=11 // pred_region
          %s283 = smul.u32 2, %s32
          %s285 = ssub.s32 256, 256
          %286 = vsyncadd [#allocation4], %s285
          %s287 = smul.addr %s283, 128
          %s288 = scalar_lea.hbm %s0, %s287
          %s290 = sshll.u32 [#allocation3], 4
          %s291 = int_to_ptr.vmem [resolvable:$true] %s290
          %293 = dma.hbm_to_vmem [thread:$0]  %s288, 256, %s291, [#allocation4]
        $region16: #{tpu_custom_call.1} parent=11 // pred_fallthru
          _
      $region12: #{tpu_custom_call.1} parent=5 // pred_fallthru
        _
      %p294 = scmp.lt.s32.totalorder %s20, 3
      // Predicated region
      $region17: #{tpu_custom_call.1} parent=5 // pred_check
        %p295 = pneg %p294
      $region18: #{tpu_custom_call.1} parent=5 // pred_check_branch
        %297 = sbr.rel (%p295) target = $region20
      $region19: #{tpu_custom_call.1} parent=5 // pred_region
        // Predicated region
        $region21: #{tpu_custom_call.1} parent=19 // pred_check
          %p298 = pneg %p89
        $region22: #{tpu_custom_call.1} parent=19 // pred_check_branch
          %300 = sbr.rel (%p298) target = $region24
        $region23: #{tpu_custom_call.1} parent=19 // pred_region
          %s301 = sand.u32 %s20, 1
          %s302 = scalar_lea.sflag [#allocation7], %s301
          %s303 = sand.u32 %s79, 1
          %s304 = smul.addr %s303, 256
          %s305 = scalar_lea.vmem [#allocation6], %s304
          %s307 = ssub.s32 4096, 4096
          %308 = vsyncadd %s302, %s307
          %s309 = smul.addr %s29, 32
          %s310 = smul.addr %s28, 32
          %s311 = sadd.s32 %s309, %s310
          %s312 = smul.addr %s27, 32
          %s313 = sadd.s32 %s311, %s312
          %s314 = smul.addr %s313, 128
          %s315 = scalar_lea.hbm %s1, %s314
          %s316 = sshll.u32 %s305, 4
          %s317 = int_to_ptr.vmem [resolvable:$true] %s316
          %322 = dma.hbm_to_vmem [thread:$0]  %s315, 4096, %s317, %s302, 128, 128, 8
        $region24: #{tpu_custom_call.1} parent=19 // pred_fallthru
          _
        // Predicated region
        $region25: #{tpu_custom_call.1} parent=19 // pred_check
          %p323 = pneg %p119
        $region26: #{tpu_custom_call.1} parent=19 // pred_check_branch
          %325 = sbr.rel (%p323) target = $region28
        $region27: #{tpu_custom_call.1} parent=19 // pred_region
          %s326 = sand.u32 %s20, 1
          %s327 = scalar_lea.sflag [#allocation7], %s326
          %s328 = sand.u32 %s109, 1
          %s329 = smul.addr %s328, 256
          %s330 = scalar_lea.vmem [#allocation8], %s329
          %s332 = ssub.s32 4096, 4096
          %333 = vsyncadd %s327, %s332
          %s334 = smul.addr %s29, 32
          %s335 = smul.addr %s28, 32
          %s336 = sadd.s32 %s334, %s335
          %s337 = smul.addr %s27, 32
          %s338 = sadd.s32 %s336, %s337
          %s339 = smul.addr %s338, 128
          %s340 = scalar_lea.hbm %s2, %s339
          %s341 = sshll.u32 %s330, 4
          %s342 = int_to_ptr.vmem [resolvable:$true] %s341
          %347 = dma.hbm_to_vmem [thread:$0]  %s340, 4096, %s342, %s327, 128, 128, 8
        $region28: #{tpu_custom_call.1} parent=19 // pred_fallthru
          _
        // Predicated region
        $region29: #{tpu_custom_call.1} parent=19 // pred_check
          %p348 = pneg %p147
        $region30: #{tpu_custom_call.1} parent=19 // pred_check_branch
          %350 = sbr.rel (%p348) target = $region32
        $region31: #{tpu_custom_call.1} parent=19 // pred_region
          %s351 = smul.u32 2, %s29
          %p352 = scmp.lt.s32.totalorder %s27, 2
          %s353 = scalar_select %p352, %s27, 2
          %p354 = scmp.lt.s32.totalorder %s351, 1
          %s355 = scalar_select %p354, %s351, 1
          %s356 = smul.addr %s353, 2
          %s357 = sadd.s32 %s355, %s356
          %s358 = scalar_lea.vmem %s3, %s357
          %s359 = smul.u32 2, %s29
        $region32: #{tpu_custom_call.1} parent=19 // pred_fallthru
          _
        // Predicated region
        $region33: #{tpu_custom_call.1} parent=19 // pred_check
          %p360 = pneg %p175
        $region34: #{tpu_custom_call.1} parent=19 // pred_check_branch
          %362 = sbr.rel (%p360) target = $region36
        $region35: #{tpu_custom_call.1} parent=19 // pred_region
          %p363 = scmp.lt.s32.totalorder %s27, 2
          %s364 = scalar_select %p363, %s27, 2
          %p365 = scmp.lt.s32.totalorder %s28, 0
          %s366 = scalar_select %p365, %s28, 0
          %s367 = sadd.s32 %s366, %s364
          %s368 = scalar_lea.vmem %s4, %s367
        $region36: #{tpu_custom_call.1} parent=19 // pred_fallthru
          _
        // Predicated region
        $region37: #{tpu_custom_call.1} parent=19 // pred_check
          %p369 = pneg %p203
        $region38: #{tpu_custom_call.1} parent=19 // pred_check_branch
          %371 = sbr.rel (%p369) target = $region40
        $region39: #{tpu_custom_call.1} parent=19 // pred_region
          %p372 = scmp.lt.s32.totalorder %s27, 2
          %s373 = scalar_select %p372, %s27, 2
          %p374 = scmp.lt.s32.totalorder %s28, 0
          %s375 = scalar_select %p374, %s28, 0
          %s376 = sadd.s32 %s375, %s373
          %s377 = scalar_lea.vmem %s5, %s376
        $region40: #{tpu_custom_call.1} parent=19 // pred_fallthru
          _
        // Predicated region
        $region41: #{tpu_custom_call.1} parent=19 // pred_check
          %p378 = pneg %p231
        $region42: #{tpu_custom_call.1} parent=19 // pred_check_branch
          %380 = sbr.rel (%p378) target = $region44
        $region43: #{tpu_custom_call.1} parent=19 // pred_region
          %p381 = scmp.lt.s32.totalorder %s27, 2
          %s382 = scalar_select %p381, %s27, 2
          %p383 = scmp.lt.s32.totalorder %s28, 0
          %s384 = scalar_select %p383, %s28, 0
          %s385 = sadd.s32 %s384, %s382
          %s386 = scalar_lea.vmem %s6, %s385
        $region44: #{tpu_custom_call.1} parent=19 // pred_fallthru
          _
      $region20: #{tpu_custom_call.1} parent=5 // pred_fallthru
        _
      %p387 = scmp.le.s32.totalorder 1, %s20
      %p388 = scmp.lt.s32.totalorder %s20, 4
      %p389 = pnand %p387, %p388
      %p390 = pneg %p389
      // Predicated region
      $region45: #{tpu_custom_call.1} parent=5 // pred_check
        _
      $region46: #{tpu_custom_call.1} parent=5 // pred_check_branch
        %392 = sbr.rel (%p389) target = $region48
      $region47: #{tpu_custom_call.1} parent=5 // pred_region
        %s393 = ssub.s32 %s20, 1
        // Predicated region
        $region49: #{tpu_custom_call.1} parent=47 // pred_check
          %p394 = pneg %p65
        $region50: #{tpu_custom_call.1} parent=47 // pred_check_branch
          %396 = sbr.rel (%p394) target = $region52
        $region51: #{tpu_custom_call.1} parent=47 // pred_region
          %397 = dma.done [#allocation4], 256
        $region52: #{tpu_custom_call.1} parent=47 // pred_fallthru
          _
        %s398 = sand.u32 %s25, 1
        %s399 = scalar_lea.sflag [#allocation7], %s398
        %s400 = sand.u32 %s82, 1
        %s401 = smul.addr %s400, 256
        %s402 = scalar_lea.vmem [#allocation6], %s401
        // Predicated region
        $region53: #{tpu_custom_call.1} parent=47 // pred_check
          %p403 = pneg %p95
        $region54: #{tpu_custom_call.1} parent=47 // pred_check_branch
          %405 = sbr.rel (%p403) target = $region56
        $region55: #{tpu_custom_call.1} parent=47 // pred_region
          %406 = dma.done %s399, 4096
        $region56: #{tpu_custom_call.1} parent=47 // pred_fallthru
          _
        %s407 = sand.u32 %s25, 1
        %s408 = scalar_lea.sflag [#allocation7], %s407
        %s409 = sand.u32 %s112, 1
        %s410 = smul.addr %s409, 256
        %s411 = scalar_lea.vmem [#allocation8], %s410
        // Predicated region
        $region57: #{tpu_custom_call.1} parent=47 // pred_check
          %p412 = pneg %p125
        $region58: #{tpu_custom_call.1} parent=47 // pred_check_branch
          %414 = sbr.rel (%p412) target = $region60
        $region59: #{tpu_custom_call.1} parent=47 // pred_region
          %415 = dma.done %s408, 4096
        $region60: #{tpu_custom_call.1} parent=47 // pred_fallthru
          _
        %p416 = pneg %p65
        %p417 = pneg %p62
        %s418 = sand.u32 %s25, 1
        %s419 = scalar_lea.sflag [#allocation7], %s418
        %s420 = sand.u32 %s82, 1
        %s421 = smul.addr %s420, 256
        %s422 = scalar_lea.vmem [#allocation6], %s421
        %p423 = pneg %p95
        %p424 = pneg %p92
        %s425 = sand.u32 %s25, 1
        %s426 = scalar_lea.sflag [#allocation7], %s425
        %s427 = sand.u32 %s112, 1
        %s428 = smul.addr %s427, 256
        %s429 = scalar_lea.vmem [#allocation8], %s428
        %p430 = pneg %p125
        %p431 = pneg %p122
        %s432 = smul.u32 2, %s32
        %p433 = scmp.lt.s32.totalorder %s30, 2
        %s434 = scalar_select %p433, %s30, 2
        %p435 = scmp.lt.s32.totalorder %s432, 1
        %s436 = scalar_select %p435, %s432, 1
        %s437 = smul.addr %s434, 2
        %s438 = sadd.s32 %s436, %s437
        %s439 = scalar_lea.vmem %s3, %s438
        %p440 = pneg %p153
        %p441 = pneg %p150
        %p442 = scmp.lt.s32.totalorder %s30, 2
        %s443 = scalar_select %p442, %s30, 2
        %p444 = scmp.lt.s32.totalorder %s31, 0
        %s445 = scalar_select %p444, %s31, 0
        %s446 = sadd.s32 %s445, %s443
        %s447 = scalar_lea.vmem %s4, %s446
        %p448 = pneg %p181
        %p449 = pneg %p178
        %p450 = scmp.lt.s32.totalorder %s30, 2
        %s451 = scalar_select %p450, %s30, 2
        %p452 = scmp.lt.s32.totalorder %s31, 0
        %s453 = scalar_select %p452, %s31, 0
        %s454 = sadd.s32 %s453, %s451
        %s455 = scalar_lea.vmem %s5, %s454
        %p456 = pneg %p209
        %p457 = pneg %p206
        %p458 = scmp.lt.s32.totalorder %s30, 2
        %s459 = scalar_select %p458, %s30, 2
        %p460 = scmp.lt.s32.totalorder %s31, 0
        %s461 = scalar_select %p460, %s31, 0
        %s462 = sadd.s32 %s461, %s459
        %s463 = scalar_lea.vmem %s6, %s462
        %p464 = pneg %p237
        %p465 = pneg %p234
        %p466 = pneg %p265
        %p467 = pneg %p262
        %s468 = sand.u32 %s252, 1
        %s469 = scalar_lea.sflag [#allocation5], %s468
        %s470 = sand.u32 %s252, 1
        %s471 = smul.addr %s470, 8
        %s472 = scalar_lea.vmem [#allocation9], %s471
        %s473 = smul.u32 2, %s32
        %s474 = smul.u32 2, %s32
        %p475 = scmp.lt.s32.totalorder %s30, 2
        %s476 = scalar_select %p475, %s30, 2
        %p477 = scmp.lt.s32.totalorder %s474, 1
        %s478 = scalar_select %p477, %s474, 1
        %s479 = smul.addr %s476, 2
        %s480 = sadd.s32 %s478, %s479
        %s481 = scalar_lea.vmem %s3, %s480
        %s482 = smul.u32 2, %s32
        %p483 = scmp.lt.s32.totalorder %s30, 2
        %s484 = scalar_select %p483, %s30, 2
        %p485 = scmp.lt.s32.totalorder %s31, 0
        %s486 = scalar_select %p485, %s31, 0
        %s487 = sadd.s32 %s486, %s484
        %s488 = scalar_lea.vmem %s4, %s487
        %p489 = scmp.lt.s32.totalorder %s30, 2
        %s490 = scalar_select %p489, %s30, 2
        %p491 = scmp.lt.s32.totalorder %s31, 0
        %s492 = scalar_select %p491, %s31, 0
        %s493 = sadd.s32 %s492, %s490
        %s494 = scalar_lea.vmem %s5, %s493
        %p495 = scmp.lt.s32.totalorder %s30, 2
        %s496 = scalar_select %p495, %s30, 2
        %p497 = scmp.lt.s32.totalorder %s31, 0
        %s498 = scalar_select %p497, %s31, 0
        %s499 = sadd.s32 %s498, %s496
        %s500 = scalar_lea.vmem %s6, %s499
        %s501 = sadd.s32 %s30, %s31
        %p502 = scmp.eq.s32.totalorder %s32, 0
        // Predicated region
        $region61: #{tpu_custom_call.1} parent=47 // pred_check
          %p503 = pneg %p502
        $region62: #{tpu_custom_call.1} parent=47 // pred_check_branch
          %505 = sbr.rel (%p503) target = $region64
        $region63: #{tpu_custom_call.1} parent=47 // pred_region
          %506 = vst [vmem:[#allocation2] sm:$0xff] 0.0
        $region64: #{tpu_custom_call.1} parent=47 // pred_fallthru
          _
        %v507 = vld [vmem:[#allocation3] sm:$0xff]
        %v508 = vld [vmem:[#allocation3 + $0x8] sm:$0xff]
        %v509 = vld [vmem:[%s481] sm:$0x3]
        %v510 = vld [vmem:[%s488] sm:$0x1]
        %v511 = vld [vmem:[%s402] sm:$0xff]
        %v512 = vld [vmem:[%s402 + $0x8] sm:$0xff]
        %v513 = vld [vmem:[%s402 + $0x10] sm:$0xff]
        %v514 = vld [vmem:[%s402 + $0x18] sm:$0xff]
        %v515 = vld [vmem:[%s402 + $0x20] sm:$0xff]
        %v516 = vld [vmem:[%s402 + $0x28] sm:$0xff]
        %v517 = vld [vmem:[%s402 + $0x30] sm:$0xff]
        %v518 = vld [vmem:[%s402 + $0x38] sm:$0xff]
        %v519 = vld [vmem:[%s402 + $0x40] sm:$0xff]
        %v520 = vld [vmem:[%s402 + $0x48] sm:$0xff]
        %v521 = vld [vmem:[%s402 + $0x50] sm:$0xff]
        %v522 = vld [vmem:[%s402 + $0x58] sm:$0xff]
        %v523 = vld [vmem:[%s402 + $0x60] sm:$0xff]
        %v524 = vld [vmem:[%s402 + $0x68] sm:$0xff]
        %v525 = vld [vmem:[%s402 + $0x70] sm:$0xff]
        %v526 = vld [vmem:[%s402 + $0x78] sm:$0xff]
        %v527 = vld [vmem:[%s402 + $0x80] sm:$0xff]
        %v528 = vld [vmem:[%s402 + $0x88] sm:$0xff]
        %v529 = vld [vmem:[%s402 + $0x90] sm:$0xff]
        %v530 = vld [vmem:[%s402 + $0x98] sm:$0xff]
        %v531 = vld [vmem:[%s402 + $0xa0] sm:$0xff]
        %v532 = vld [vmem:[%s402 + $0xa8] sm:$0xff]
        %v533 = vld [vmem:[%s402 + $0xb0] sm:$0xff]
        %v534 = vld [vmem:[%s402 + $0xb8] sm:$0xff]
        %v535 = vld [vmem:[%s402 + $0xc0] sm:$0xff]
        %v536 = vld [vmem:[%s402 + $0xc8] sm:$0xff]
        %v537 = vld [vmem:[%s402 + $0xd0] sm:$0xff]
        %v538 = vld [vmem:[%s402 + $0xd8] sm:$0xff]
        %v539 = vld [vmem:[%s402 + $0xe0] sm:$0xff]
        %v540 = vld [vmem:[%s402 + $0xe8] sm:$0xff]
        %v541 = vld [vmem:[%s402 + $0xf0] sm:$0xff]
        %v542 = vld [vmem:[%s402 + $0xf8] sm:$0xff]
        %v543 = vld [vmem:[%s411] sm:$0xff]
        %v544 = vld [vmem:[%s411 + $0x8] sm:$0xff]
        %v545 = vld [vmem:[%s411 + $0x10] sm:$0xff]
        %v546 = vld [vmem:[%s411 + $0x18] sm:$0xff]
        %v547 = vld [vmem:[%s411 + $0x20] sm:$0xff]
        %v548 = vld [vmem:[%s411 + $0x28] sm:$0xff]
        %v549 = vld [vmem:[%s411 + $0x30] sm:$0xff]
        %v550 = vld [vmem:[%s411 + $0x38] sm:$0xff]
        %v551 = vld [vmem:[%s411 + $0x40] sm:$0xff]
        %v552 = vld [vmem:[%s411 + $0x48] sm:$0xff]
        %v553 = vld [vmem:[%s411 + $0x50] sm:$0xff]
        %v554 = vld [vmem:[%s411 + $0x58] sm:$0xff]
        %v555 = vld [vmem:[%s411 + $0x60] sm:$0xff]
        %v556 = vld [vmem:[%s411 + $0x68] sm:$0xff]
        %v557 = vld [vmem:[%s411 + $0x70] sm:$0xff]
        %v558 = vld [vmem:[%s411 + $0x78] sm:$0xff]
        %v559 = vld [vmem:[%s411 + $0x80] sm:$0xff]
        %v560 = vld [vmem:[%s411 + $0x88] sm:$0xff]
        %v561 = vld [vmem:[%s411 + $0x90] sm:$0xff]
        %v562 = vld [vmem:[%s411 + $0x98] sm:$0xff]
        %v563 = vld [vmem:[%s411 + $0xa0] sm:$0xff]
        %v564 = vld [vmem:[%s411 + $0xa8] sm:$0xff]
        %v565 = vld [vmem:[%s411 + $0xb0] sm:$0xff]
        %v566 = vld [vmem:[%s411 + $0xb8] sm:$0xff]
        %v567 = vld [vmem:[%s411 + $0xc0] sm:$0xff]
        %v568 = vld [vmem:[%s411 + $0xc8] sm:$0xff]
        %v569 = vld [vmem:[%s411 + $0xd0] sm:$0xff]
        %v570 = vld [vmem:[%s411 + $0xd8] sm:$0xff]
        %v571 = vld [vmem:[%s411 + $0xe0] sm:$0xff]
        %v572 = vld [vmem:[%s411 + $0xe8] sm:$0xff]
        %v573 = vld [vmem:[%s411 + $0xf0] sm:$0xff]
        %v574 = vld [vmem:[%s411 + $0xf8] sm:$0xff]
        %v576 = vlaneseq
        %v577 = vshrl.u32 %v576, 7
        %v578 = vsub.s32 0, %v577
        %v579 = vrot.slane %v509, %v578
        %v580 = vlaneseq
        %v581 = vshrl.u32 %v580, 7
        %v582 = vsub.s32 1, %v581
        %v583 = vrot.slane %v509, %v582
        %v586 = vmul.f32 %v507, %v579
        %v587 = vmul.f32 %v508, %v583
        %588 = vmatprep.subr.mxu0 0.0
        %589 = vmatpush1.msra.mxu0 %v543
        %590 = vmatprep.subr.mxu0 0.0
        %591 = vmatpush1.msra.mxu0 %v544
        %592 = vmatprep.subr.mxu0 0.0
        %593 = vmatpush1.msra.mxu0 %v545
        %594 = vmatprep.subr.mxu0 0.0
        %595 = vmatpush1.msra.mxu0 %v546
        %596 = vmatprep.subr.mxu0 0.0
        %597 = vmatpush1.msra.mxu0 %v547
        %598 = vmatprep.subr.mxu0 0.0
        %599 = vmatpush1.msra.mxu0 %v548
        %600 = vmatprep.subr.mxu0 0.0
        %601 = vmatpush1.msra.mxu0 %v549
        %602 = vmatprep.subr.mxu0 0.0
        %603 = vmatpush1.msra.mxu0 %v550
        %604 = vmatprep.subr.mxu0 0.0
        %605 = vmatpush1.msra.mxu0 %v551
        %606 = vmatprep.subr.mxu0 0.0
        %607 = vmatpush1.msra.mxu0 %v552
        %608 = vmatprep.subr.mxu0 0.0
        %609 = vmatpush1.msra.mxu0 %v553
        %610 = vmatprep.subr.mxu0 0.0
        %611 = vmatpush1.msra.mxu0 %v554
        %612 = vmatprep.subr.mxu0 0.0
        %613 = vmatpush1.msra.mxu0 %v555
        %614 = vmatprep.subr.mxu0 0.0
        %615 = vmatpush1.msra.mxu0 %v556
        %616 = vmatprep.subr.mxu0 0.0
        %617 = vmatpush1.msra.mxu0 %v557
        %618 = vmatprep.subr.mxu0 0.0
        %619 = vmatpush1.msra.mxu0 %v558
        %620 = vmatprep.subr.mxu0 0.0
        %621 = vmatpush1.msra.mxu0 %v559
        %622 = vmatprep.subr.mxu0 0.0
        %623 = vmatpush1.msra.mxu0 %v560
        %624 = vmatprep.subr.mxu0 0.0
        %625 = vmatpush1.msra.mxu0 %v561
        %626 = vmatprep.subr.mxu0 0.0
        %627 = vmatpush1.msra.mxu0 %v562
        %628 = vmatprep.subr.mxu0 0.0
        %629 = vmatpush1.msra.mxu0 %v563
        %630 = vmatprep.subr.mxu0 0.0
        %631 = vmatpush1.msra.mxu0 %v564
        %632 = vmatprep.subr.mxu0 0.0
        %633 = vmatpush1.msra.mxu0 %v565
        %634 = vmatprep.subr.mxu0 0.0
        %635 = vmatpush1.msra.mxu0 %v566
        %636 = vmatprep.subr.mxu0 0.0
        %637 = vmatpush1.msra.mxu0 %v567
        %638 = vmatprep.subr.mxu0 0.0
        %639 = vmatpush1.msra.mxu0 %v568
        %640 = vmatprep.subr.mxu0 0.0
        %641 = vmatpush1.msra.mxu0 %v569
        %642 = vmatprep.subr.mxu0 0.0
        %643 = vmatpush1.msra.mxu0 %v570
        %644 = vmatprep.subr.mxu0 0.0
        %645 = vmatpush1.msra.mxu0 %v571
        %646 = vmatprep.subr.mxu0 0.0
        %647 = vmatpush1.msra.mxu0 %v572
        %648 = vmatprep.subr.mxu0 0.0
        %649 = vmatpush1.msra.mxu0 %v573
        %650 = vmatprep.subr.mxu0 0.0
        %651 = vmatpush1.msra.mxu0 %v574
        %652 = vmatprep.mubr.f32.mxu0 %v587
        %653 = vmatmul.mubr.f32.gmra.mrb[0].mxu0 %v586
        %v654 = vpop.f32.mrb[0].mxu0
        %v655 = vadd.f32 0.0, %v654
        %v656 = vpop.f32.mrb[0].mxu0
        %657 = vdwg.mxu0
        %v658 = vld [vmem:[#allocation2] sm:$0xff]
        %v660 = vlaneseq
        %v661 = vshrl.u32 %v660, 7
        %v662 = vsub.s32 0, %v661
        %v663 = vrot.slane %v510, %v662
        %v665 = vmul.f32 %v655, %v663
        %666 = vmatprep.subr.mxu0 0.0
        %667 = vmatpush1.msra.mxu0 %v511
        %668 = vmatprep.subr.mxu0 0.0
        %669 = vmatpush1.msra.mxu0 %v512
        %670 = vmatprep.subr.mxu0 0.0
        %671 = vmatpush1.msra.mxu0 %v513
        %672 = vmatprep.subr.mxu0 0.0
        %673 = vmatpush1.msra.mxu0 %v514
        %674 = vmatprep.subr.mxu0 0.0
        %675 = vmatpush1.msra.mxu0 %v515
        %676 = vmatprep.subr.mxu0 0.0
        %677 = vmatpush1.msra.mxu0 %v516
        %678 = vmatprep.subr.mxu0 0.0
        %679 = vmatpush1.msra.mxu0 %v517
        %680 = vmatprep.subr.mxu0 0.0
        %681 = vmatpush1.msra.mxu0 %v518
        %682 = vmatprep.subr.mxu0 0.0
        %683 = vmatpush1.msra.mxu0 %v519
        %684 = vmatprep.subr.mxu0 0.0
        %685 = vmatpush1.msra.mxu0 %v520
        %686 = vmatprep.subr.mxu0 0.0
        %687 = vmatpush1.msra.mxu0 %v521
        %688 = vmatprep.subr.mxu0 0.0
        %689 = vmatpush1.msra.mxu0 %v522
        %690 = vmatprep.subr.mxu0 0.0
        %691 = vmatpush1.msra.mxu0 %v523
        %692 = vmatprep.subr.mxu0 0.0
        %693 = vmatpush1.msra.mxu0 %v524
        %694 = vmatprep.subr.mxu0 0.0
        %695 = vmatpush1.msra.mxu0 %v525
        %696 = vmatprep.subr.mxu0 0.0
        %697 = vmatpush1.msra.mxu0 %v526
        %698 = vmatprep.subr.mxu0 0.0
        %699 = vmatpush1.msra.mxu0 %v527
        %700 = vmatprep.subr.mxu0 0.0
        %701 = vmatpush1.msra.mxu0 %v528
        %702 = vmatprep.subr.mxu0 0.0
        %703 = vmatpush1.msra.mxu0 %v529
        %704 = vmatprep.subr.mxu0 0.0
        %705 = vmatpush1.msra.mxu0 %v530
        %706 = vmatprep.subr.mxu0 0.0
        %707 = vmatpush1.msra.mxu0 %v531
        %708 = vmatprep.subr.mxu0 0.0
        %709 = vmatpush1.msra.mxu0 %v532
        %710 = vmatprep.subr.mxu0 0.0
        %711 = vmatpush1.msra.mxu0 %v533
        %712 = vmatprep.subr.mxu0 0.0
        %713 = vmatpush1.msra.mxu0 %v534
        %714 = vmatprep.subr.mxu0 0.0
        %715 = vmatpush1.msra.mxu0 %v535
        %716 = vmatprep.subr.mxu0 0.0
        %717 = vmatpush1.msra.mxu0 %v536
        %718 = vmatprep.subr.mxu0 0.0
        %719 = vmatpush1.msra.mxu0 %v537
        %720 = vmatprep.subr.mxu0 0.0
        %721 = vmatpush1.msra.mxu0 %v538
        %722 = vmatprep.subr.mxu0 0.0
        %723 = vmatpush1.msra.mxu0 %v539
        %724 = vmatprep.subr.mxu0 0.0
        %725 = vmatpush1.msra.mxu0 %v540
        %726 = vmatprep.subr.mxu0 0.0
        %727 = vmatpush1.msra.mxu0 %v541
        %728 = vmatprep.subr.mxu0 0.0
        %729 = vmatpush1.msra.mxu0 %v542
        %730 = vmatprep.mubr.f32.mxu0 %v508
        %731 = vmatmul.mubr.f32.gmra.mrb[0].mxu0 %v507
        %v732 = vpop.f32.mrb[0].mxu0
        %v733 = vadd.f32 %v665, %v732
        %v734 = vpop.f32.mrb[0].mxu0
        %735 = vdwg.mxu0
        %v736 = vadd.f32 %v658, %v733
        %737 = vst [vmem:[#allocation2] sm:$0xff] %v736
        // Predicated region
        $region65: #{tpu_custom_call.1} parent=47 // pred_check
          %p738 = pneg %p502
        $region66: #{tpu_custom_call.1} parent=47 // pred_check_branch
          %740 = sbr.rel (%p738) target = $region68
        $region67: #{tpu_custom_call.1} parent=47 // pred_region
          %v741 = vld [vmem:[%s494] sm:$0x1]
          %v742 = vld [vmem:[%s500] sm:$0x1]
          %v743 = vmul.f32 %v742, %v510
          %v744 = vadd.f32 %v741, %v743
          %v745 = vld [vmem:[#allocation2] sm:$0xff]
          %v747 = vlaneseq
          %v748 = vshrl.u32 %v747, 7
          %v749 = vsub.s32 0, %v748
          %v750 = vrot.slane %v744, %v749
          %v752 = vadd.f32 %v745, %v750
          %753 = vst [vmem:[%s472] sm:$0xff] %v752
        $region68: #{tpu_custom_call.1} parent=47 // pred_fallthru
          _
        %s754 = sand.u32 %s252, 1
        %s755 = scalar_lea.sflag [#allocation5], %s754
        %s756 = sand.u32 %s252, 1
        %s757 = smul.addr %s756, 8
        %s758 = scalar_lea.vmem [#allocation9], %s757
        // Predicated region
        $region69: #{tpu_custom_call.1} parent=47 // pred_check
          %p759 = pneg %p262
        $region70: #{tpu_custom_call.1} parent=47 // pred_check_branch
          %761 = sbr.rel (%p759) target = $region72
        $region71: #{tpu_custom_call.1} parent=47 // pred_region
          %s762 = sadd.s32 %s30, %s31
          %s764 = ssub.s32 128, 128
          %765 = vsyncadd %s755, %s764
          %s766 = smul.addr %s762, 128
          %s767 = scalar_lea.hbm %s7, %s766
          %s769 = sshll.u32 %s758, 4
          %s770 = int_to_ptr.vmem [resolvable:$true] %s769
          %772 = dma.vmem_to_hbm [thread:$0]  %s770, 128, %s767, %s755
        $region72: #{tpu_custom_call.1} parent=47 // pred_fallthru
          _
      $region48: #{tpu_custom_call.1} parent=5 // pred_fallthru
        _
      %p773 = scmp.le.s32.totalorder 2, %s20
      // Predicated region
      $region73: #{tpu_custom_call.1} parent=5 // pred_check
        %p774 = pneg %p773
      $region74: #{tpu_custom_call.1} parent=5 // pred_check_branch
        %776 = sbr.rel (%p774) target = $region76
      $region75: #{tpu_custom_call.1} parent=5 // pred_region
        %s777 = ssub.s32 %s20, 2
        // Predicated region
        $region77: #{tpu_custom_call.1} parent=75 // pred_check
          %p778 = pneg %p268
        $region78: #{tpu_custom_call.1} parent=75 // pred_check_branch
          %780 = sbr.rel (%p778) target = $region80
        $region79: #{tpu_custom_call.1} parent=75 // pred_region
          %s781 = sand.u32 %s253, 1
          %s782 = scalar_lea.sflag [#allocation5], %s781
          %s783 = sand.u32 %s253, 1
          %s784 = smul.addr %s783, 8
          %s785 = scalar_lea.vmem [#allocation9], %s784
          %786 = dma.done %s782, 128
        $region80: #{tpu_custom_call.1} parent=75 // pred_fallthru
          _
      $region76: #{tpu_custom_call.1} parent=5 // pred_fallthru
        _
    $region6: #{tpu_custom_call.1} parent=1 // loop_footer
      %s24 = sadd.s32 1, %s20
    $region7: #{tpu_custom_call.1} parent=1 // loop_footer_branch
      %19 = sbr.rel target = $region3
    $region8: #{tpu_custom_call.1} parent=1 // loop_exit
      _
    %787 = vsyncpa [#allocation4], 1
    %s788 = scalar_lea.sflag [#allocation4], 1
    %789 = vsyncpa %s788, 1
    %790 = vsyncpa [#allocation7], 1
    %s791 = scalar_lea.sflag [#allocation7], 1
    %792 = vsyncpa %s791, 1
    %793 = vsyncpa [#allocation5], 1
    %s794 = scalar_lea.sflag [#allocation5], 1
    %795 = vsyncpa %s794, 1

</llo_original>
